<compile_context>
chip_gen: v5e
topology: v5e:2x2
jax: 0.10.0
libtpu: 0.0.40
codegen_flags: <defaults>
</compile_context>

<pallas_src>
import functools

import jax
import jax.numpy as jnp
from jax.experimental import pallas as pl
from jax.experimental.pallas import tpu as pltpu

RHO = 0.1
LOOP = int(1 / RHO)          # 10 structured mask slices
BN_EPS = 1e-5
LEAKY_SLOPE = 0.2
LANE = 128                   # TPU lane width (pad class dim to this)
SUBLANE = 8


# ----------------------------------------------------------------------------
# Fused Pallas kernel: masked fc1 (BN1+BN2 folded) -> LReLU ->
#                      masked fc2 (BN3 folded)     -> LReLU -> masked fc3
# All intermediates stay in VMEM/vregs; one pallas_call for the whole head.
# ----------------------------------------------------------------------------
def _head_kernel(idx_ref,            # scalar prefetch (consumed by index_maps)
                 x_ref,              # (TB, K1)    f32
                 w1_ref,             # (K1, N1)    bf16  (mask + BN1 + BN2 folded)
                 w2_ref,             # (N1, N2)    bf16  (mask + BN3 folded)
                 w3_ref,             # (N2, NP)    bf16  (mask, class dim padded)
                 bias_ref,           # (8, BC)     f32   (row0=b1, row1=b2, row2=b3)
                 o_ref):             # (TB, NP)    f32
    del idx_ref

    n1 = w1_ref.shape[1]
    n2 = w2_ref.shape[1]
    npad = w3_ref.shape[1]

    b1 = bias_ref[0:1, :n1]          # (1, N1)
    b2 = bias_ref[1:2, :n2]          # (1, N2)
    b3 = bias_ref[2:3, :npad]        # (1, NP)

    # Layer 1 (BN1 + BN2 already folded into w1/b1) + LeakyReLU(0.2).
    x = x_ref[...].astype(jnp.bfloat16)
    h = jnp.dot(x, w1_ref[...], preferred_element_type=jnp.float32) + b1
    h = jnp.where(h >= 0, h, LEAKY_SLOPE * h)

    # Layer 2 (BN3 folded into w2/b2) + LeakyReLU(0.2).
    h = jnp.dot(h.astype(jnp.bfloat16), w2_ref[...],
                preferred_element_type=jnp.float32) + b2
    h = jnp.where(h >= 0, h, LEAKY_SLOPE * h)

    # Layer 3 (output padded to lane width).
    o_ref[...] = jnp.dot(h.astype(jnp.bfloat16), w3_ref[...],
                         preferred_element_type=jnp.float32) + b3


@functools.partial(jax.jit, static_argnames=("classes",))
def model_bn_forward(fused, x, index, *, classes):
    """x: features_1 output, shape (B, 512, 1, 1). Returns (B, classes)."""
    # TODO(synk): self.features_1 is a VGG16 backbone loaded via torch.load of an
    # external checkpoint (not defined in-script); `x` stands in for its output.
    B = x.shape[0]
    x2d = x.reshape(B, -1).astype(jnp.float32)                 # (B, K1)

    K1, N1 = fused["w1t"].shape[1], fused["w1t"].shape[2]
    N2 = fused["w2t"].shape[2]
    NP = fused["w3t"].shape[2]
    BC = fused["bias"].shape[2]

    # Pad batch to a sublane multiple; tile it with a parallel grid axis.
    b_pad = ((B + SUBLANE - 1) // SUBLANE) * SUBLANE
    tb = min(b_pad, 256)
    b_pad = ((b_pad + tb - 1) // tb) * tb
    if b_pad != B:
        x2d = jnp.pad(x2d, ((0, b_pad - B), (0, 0)))

    # Guard the mask-slice index, keep it a traced device scalar.
    idx = jnp.clip(jnp.asarray(index, jnp.int32), 0, LOOP - 1).reshape(1)

    def stacked(k, n):
        # Per-index slice of the (LOOP, k, n) stack; constant across the batch
        # axis so the tile stays VMEM-resident across grid iterations.
        return pl.BlockSpec((pl.Squeezed(), k, n), lambda i, ix: (ix[0], 0, 0))

    grid_spec = pltpu.PrefetchScalarGridSpec(
        num_scalar_prefetch=1,
        grid=(b_pad // tb,),
        in_specs=[
            pl.BlockSpec((tb, K1), lambda i, ix: (i, 0)),   # x tile
            stacked(K1, N1),                                # fc1 weight (folded, bf16)
            stacked(N1, N2),                                # fc2 weight (folded, bf16)
            stacked(N2, NP),                                # fc3 weight (padded, bf16)
            stacked(SUBLANE, BC),                           # packed bias slab (f32)
        ],
        out_specs=pl.BlockSpec((tb, NP), lambda i, ix: (i, 0)),
    )

    out_padded = pl.pallas_call(
        _head_kernel,
        out_shape=jax.ShapeDtypeStruct((b_pad, NP), jnp.float32),
        grid_spec=grid_spec,
        compiler_params=pltpu.CompilerParams(
            dimension_semantics=("parallel",)),
    )(idx, x2d, fused["w1t"], fused["w2t"], fused["w3t"], fused["bias"])

    return out_padded[:B, :classes]


# ----------------------------------------------------------------------------
# Deterministic parameter construction (mirrors the PyTorch __init__)
# ----------------------------------------------------------------------------
def make_structured_mask(key, out_features, in_features, rho=RHO):
    """Replicates mask(): partition a random permutation of all O*I positions
    into 1/rho chunks; mask slice i zeros out chunk i (10% of weights)."""
    n = out_features * in_features
    loops = int(1 / rho)
    chunk = int(rho * n)
    perm = jax.random.permutation(key, n)
    flat_ones = jnp.ones((n,), jnp.float32)
    slices = []
    for i in range(loops):
        idxs = perm[i * chunk:(i + 1) * chunk]
        slices.append(flat_ones.at[idxs].set(0.0).reshape(out_features, in_features))
    return jnp.stack(slices, axis=0)                  # (loops, out, in)


def init_dropconnect_linear(key, in_features, out_features):
    """kaiming_uniform_(a=sqrt(5)) => U(-1/sqrt(fan_in), 1/sqrt(fan_in)); same for bias."""
    kw, kb = jax.random.split(key)
    bound = 1.0 / (in_features ** 0.5)
    w = jax.random.uniform(kw, (out_features, in_features), jnp.float32, -bound, bound)
    b = jax.random.uniform(kb, (out_features,), jnp.float32, -bound, bound)
    return w, b


def init_batchnorm1d(key, num_features):
    """Synthetic 'trained' BN stats (non-trivial, to exercise the folds); in eval
    mode the forward only uses these fixed values, as in the PyTorch module."""
    k1, k2, k3, k4 = jax.random.split(key, 4)
    running_mean = 0.1 * jax.random.normal(k1, (num_features,), jnp.float32)
    running_var = jax.random.uniform(k2, (num_features,), jnp.float32, 0.5, 1.5)
    gamma = jax.random.uniform(k3, (num_features,), jnp.float32, 0.5, 1.5)
    beta = 0.1 * jax.random.normal(k4, (num_features,), jnp.float32)
    return (running_mean, running_var, gamma, beta)


def init_model_bn(key, num_ftrs=512, feature_size=256, classes_num=10):
    keys = jax.random.split(key, 9)
    params = {}
    params["bn1"] = init_batchnorm1d(keys[6], num_ftrs)
    params["bn2"] = init_batchnorm1d(keys[7], feature_size)
    params["bn3"] = init_batchnorm1d(keys[8], feature_size)
    params["fc1_w"], params["fc1_b"] = init_dropconnect_linear(keys[0], num_ftrs, feature_size)
    params["fc2_w"], params["fc2_b"] = init_dropconnect_linear(keys[1], feature_size, feature_size)
    params["fc3_w"], params["fc3_b"] = init_dropconnect_linear(keys[2], feature_size, classes_num)
    params["mask1"] = make_structured_mask(keys[3], feature_size, num_ftrs)
    params["mask2"] = make_structured_mask(keys[4], feature_size, feature_size)
    params["mask3"] = make_structured_mask(keys[5], classes_num, feature_size)
    return params


def precompute_fused_head(params, classes_num):
    """One-time (outside the hot path) preparation, all in f32:
       - apply each of the LOOP structured masks, pre-transpose to (K_in, N_out),
       - fold BN1 into fc1's rows and BN2 into fc1's columns/bias,
       - fold BN3 into fc2's columns/bias,
       - pad the fc3 class dim to 128 lanes,
       - pack the three bias rows into ONE per-index (8, BC) slab,
       - cast weights to bf16 only at the very end."""
    def bn_scale_shift(p):
        m, v, g, b = p
        s = g * jax.lax.rsqrt(v + BN_EPS)
        return s, b - m * s

    s1, t1 = bn_scale_shift(params["bn1"])            # (K1,)
    s2, t2 = bn_scale_shift(params["bn2"])            # (N1,)
    s3, t3 = bn_scale_shift(params["bn3"])            # (N2,)

    # ---- layer 1: y1 = BN2(fc1(BN1(x))) ----
    w1t = jnp.transpose(params["fc1_w"][None] * params["mask1"], (0, 2, 1))  # (L,K1,N1)
    w1f = w1t * s1[None, :, None] * s2[None, None, :]                        # fold BN1, BN2
    b1f = (jnp.einsum("k,lkn->ln", t1, w1t) + params["fc1_b"][None, :]) \
        * s2[None, :] + t2[None, :]                                          # (L, N1)

    # ---- layer 2: y2 = BN3(fc2(h1)) ----
    w2t = jnp.transpose(params["fc2_w"][None] * params["mask2"], (0, 2, 1))  # (L,N1,N2)
    w2f = w2t * s3[None, None, :]
    b2f = params["fc2_b"] * s3 + t3                                          # (N2,)

    # ---- layer 3: pad classes -> 128 lanes ----
    w3t = jnp.transpose(params["fc3_w"][None] * params["mask3"], (0, 2, 1))  # (L,N2,C)
    n_pad = ((classes_num + LANE - 1) // LANE) * LANE
    w3p = jnp.zeros((LOOP, w3t.shape[1], n_pad), jnp.float32)
    w3p = w3p.at[:, :, :classes_num].set(w3t)
    b3p = jnp.zeros((n_pad,), jnp.float32).at[:classes_num].set(params["fc3_b"])

    # ---- pack all biases into one per-index (8, BC) f32 slab ----
    n1, n2 = b1f.shape[1], b2f.shape[0]
    bc = ((max(n1, n2, n_pad) + LANE - 1) // LANE) * LANE
    bias = jnp.zeros((LOOP, SUBLANE, bc), jnp.float32)
    bias = bias.at[:, 0, :n1].set(b1f)
    bias = bias.at[:, 1, :n2].set(jnp.broadcast_to(b2f, (LOOP, n2)))
    bias = bias.at[:, 2, :n_pad].set(jnp.broadcast_to(b3p, (LOOP, n_pad)))

    return {
        "w1t": w1f.astype(jnp.bfloat16),               # (L, K1, N1)
        "w2t": w2f.astype(jnp.bfloat16),               # (L, N1, N2)
        "w3t": w3p.astype(jnp.bfloat16),               # (L, N2, 128)
        "bias": bias,                                  # (L, 8, BC) f32
    }


# ----------------------------------------------------------------------------
# Pure-JAX reference (raw params, f32, no Pallas) for a correctness cross-check
# ----------------------------------------------------------------------------
def _reference_forward(params, x, index):
    def bn(x, p):
        m, v, g, b = p
        return (x - m) * g / jnp.sqrt(v + BN_EPS) + b

    def lin(x, w, mask, b):
        return x @ (w * mask).T + b

    leaky = lambda x: jnp.where(x >= 0, x, LEAKY_SLOPE * x)
    out = x.reshape(x.shape[0], -1)
    out = lin(bn(out, params["bn1"]), params["fc1_w"], params["mask1"][index], params["fc1_b"])
    out = lin(leaky(bn(out, params["bn2"])), params["fc2_w"], params["mask2"][index], params["fc2_b"])
    out = lin(leaky(bn(out, params["bn3"])), params["fc3_w"], params["mask3"][index], params["fc3_b"])
    return out


if __name__ == "__main__":
    key = jax.random.PRNGKey(0)
    k_param, k_x = jax.random.split(key)

    NUM_FTRS = 512          # fixed by the module: 512 * 1 * 1
    FEATURE_SIZE = 256      # small feature_size for the synthetic run
    CLASSES = 10
    BATCH = 8
    INDEX = 3               # which structured-DropConnect mask slice to use

    params = init_model_bn(k_param, NUM_FTRS, FEATURE_SIZE, CLASSES)
    fused = precompute_fused_head(params, CLASSES)

    # x stands in for the output of features_1(image): (B, 512, 1, 1)
    x = jax.random.normal(k_x, (BATCH, NUM_FTRS, 1, 1), jnp.float32)

    out = model_bn_forward(fused, x, jnp.int32(INDEX), classes=CLASSES)
    out = jax.block_until_ready(out)

    ref = _reference_forward(params, x, INDEX)
    assert out.shape == (BATCH, CLASSES)
    # bf16 matmul operands (f32 accumulate, f32 folds) -> relaxed tolerance vs f32 ref.
    max_err = float(jnp.max(jnp.abs(out - ref)))
    assert jnp.allclose(out, ref, atol=3e-2, rtol=3e-2), max_err

    print("KERNEL_OK")
</pallas_src>

<mosaic_0001>
module attributes {stable_mosaic.version = 11 : i64} {
  func.func @_head_kernel(%arg0: i32, %arg1: memref<1xi32, #tpu.memory_space<smem>>, %arg2: memref<8x512xf32, #tpu.memory_space<vmem>>, %arg3: memref<1x512x256xbf16, #tpu.memory_space<vmem>>, %arg4: memref<1x256x256xbf16, #tpu.memory_space<vmem>>, %arg5: memref<1x256x128xbf16, #tpu.memory_space<vmem>>, %arg6: memref<1x8x256xf32, #tpu.memory_space<vmem>>, %arg7: memref<8x128xf32, #tpu.memory_space<vmem>>) attributes {dimension_semantics = [#tpu.dimension_semantics<parallel>], iteration_bounds = array<i64: 1>, scalar_prefetch = 1 : i64, scratch_operands = 0 : i64, tpu.core_type = #tpu.core_type<tc>, window_params = [{transform_indices = @transform_0, window_bounds = array<i64: 8, 512>}, {transform_indices = @transform_1, window_bounds = array<i64: 1, 512, 256>}, {transform_indices = @transform_2, window_bounds = array<i64: 1, 256, 256>}, {transform_indices = @transform_3, window_bounds = array<i64: 1, 256, 128>}, {transform_indices = @transform_4, window_bounds = array<i64: 1, 8, 256>}, {transform_indices = @transform_5, window_bounds = array<i64: 8, 128>}]} {
    %c0 = arith.constant 0 : index
    %c0_0 = arith.constant 0 : index
    %c0_1 = arith.constant 0 : index
    %0 = vector.load %arg6[%c0, %c0_0, %c0_1] : memref<1x8x256xf32, #tpu.memory_space<vmem>>, vector<1x1x256xf32>
    %1 = vector.shape_cast %0 : vector<1x1x256xf32> to vector<1x256xf32>
    %c0_2 = arith.constant 0 : index
    %c1 = arith.constant 1 : index
    %c0_3 = arith.constant 0 : index
    %2 = vector.load %arg6[%c0_2, %c1, %c0_3] : memref<1x8x256xf32, #tpu.memory_space<vmem>>, vector<1x1x256xf32>
    %3 = vector.shape_cast %2 : vector<1x1x256xf32> to vector<1x256xf32>
    %c0_4 = arith.constant 0 : index
    %c2 = arith.constant 2 : index
    %c0_5 = arith.constant 0 : index
    %4 = vector.load %arg6[%c0_4, %c2, %c0_5] : memref<1x8x256xf32, #tpu.memory_space<vmem>>, vector<1x1x128xf32>
    %5 = vector.shape_cast %4 : vector<1x1x128xf32> to vector<1x128xf32>
    %c0_6 = arith.constant 0 : index
    %c0_7 = arith.constant 0 : index
    %6 = vector.load %arg2[%c0_6, %c0_7] : memref<8x512xf32, #tpu.memory_space<vmem>>, vector<8x512xf32>
    %7 = arith.truncf %6 : vector<8x512xf32> to vector<8x512xbf16>
    %c0_8 = arith.constant 0 : index
    %c0_9 = arith.constant 0 : index
    %c0_10 = arith.constant 0 : index
    %8 = vector.load %arg3[%c0_8, %c0_9, %c0_10] : memref<1x512x256xbf16, #tpu.memory_space<vmem>>, vector<1x512x256xbf16>
    %9 = vector.shape_cast %8 : vector<1x512x256xbf16> to vector<512x256xbf16>
    %cst = arith.constant dense<0.000000e+00> : vector<8x256xf32>
    %10 = tpu.matmul %7, %9, %cst {dimension_numbers = #tpu.dot_dimension_numbers<[1], [0], [0], [1], [0, 0, 1, 1], [], []>} : vector<8x512xbf16>, vector<512x256xbf16>, vector<8x256xf32> -> vector<8x256xf32>
    %11 = vector.broadcast %1 : vector<1x256xf32> to vector<8x256xf32>
    %12 = arith.addf %10, %11 : vector<8x256xf32>
    %cst_11 = arith.constant 0.000000e+00 : f32
    %13 = vector.broadcast %cst_11 : f32 to vector<8x256xf32>
    %14 = arith.cmpf oge, %12, %13 : vector<8x256xf32>
    %cst_12 = arith.constant 2.000000e-01 : f32
    %15 = vector.broadcast %cst_12 : f32 to vector<8x256xf32>
    %16 = arith.mulf %15, %12 : vector<8x256xf32>
    %17 = arith.select %14, %12, %16 : vector<8x256xi1>, vector<8x256xf32>
    %18 = arith.truncf %17 : vector<8x256xf32> to vector<8x256xbf16>
    %c0_13 = arith.constant 0 : index
    %c0_14 = arith.constant 0 : index
    %c0_15 = arith.constant 0 : index
    %19 = vector.load %arg4[%c0_13, %c0_14, %c0_15] : memref<1x256x256xbf16, #tpu.memory_space<vmem>>, vector<1x256x256xbf16>
    %20 = vector.shape_cast %19 : vector<1x256x256xbf16> to vector<256x256xbf16>
    %cst_16 = arith.constant dense<0.000000e+00> : vector<8x256xf32>
    %21 = tpu.matmul %18, %20, %cst_16 {dimension_numbers = #tpu.dot_dimension_numbers<[1], [0], [0], [1], [0, 0, 1, 1], [], []>} : vector<8x256xbf16>, vector<256x256xbf16>, vector<8x256xf32> -> vector<8x256xf32>
    %22 = vector.broadcast %3 : vector<1x256xf32> to vector<8x256xf32>
    %23 = arith.addf %21, %22 : vector<8x256xf32>
    %cst_17 = arith.constant 0.000000e+00 : f32
    %24 = vector.broadcast %cst_17 : f32 to vector<8x256xf32>
    %25 = arith.cmpf oge, %23, %24 : vector<8x256xf32>
    %cst_18 = arith.constant 2.000000e-01 : f32
    %26 = vector.broadcast %cst_18 : f32 to vector<8x256xf32>
    %27 = arith.mulf %26, %23 : vector<8x256xf32>
    %28 = arith.select %25, %23, %27 : vector<8x256xi1>, vector<8x256xf32>
    %29 = arith.truncf %28 : vector<8x256xf32> to vector<8x256xbf16>
    %c0_19 = arith.constant 0 : index
    %c0_20 = arith.constant 0 : index
    %c0_21 = arith.constant 0 : index
    %30 = vector.load %arg5[%c0_19, %c0_20, %c0_21] : memref<1x256x128xbf16, #tpu.memory_space<vmem>>, vector<1x256x128xbf16>
    %31 = vector.shape_cast %30 : vector<1x256x128xbf16> to vector<256x128xbf16>
    %cst_22 = arith.constant dense<0.000000e+00> : vector<8x128xf32>
    %32 = tpu.matmul %29, %31, %cst_22 {dimension_numbers = #tpu.dot_dimension_numbers<[1], [0], [0], [1], [0, 0, 1, 1], [], []>} : vector<8x256xbf16>, vector<256x128xbf16>, vector<8x128xf32> -> vector<8x128xf32>
    %33 = vector.broadcast %5 : vector<1x128xf32> to vector<8x128xf32>
    %34 = arith.addf %32, %33 : vector<8x128xf32>
    %c0_23 = arith.constant 0 : index
    %c0_24 = arith.constant 0 : index
    %35 = vector.load %arg7[%c0_23, %c0_24] : memref<8x128xf32, #tpu.memory_space<vmem>>, vector<8x128xf32>
    tpu.vector_store %arg7[%c0_23, %c0_24], %34 {strides = array<i32>} : memref<8x128xf32, #tpu.memory_space<vmem>>, vector<8x128xf32>,
    return
  }
  func.func @transform_0(%arg0: i32, %arg1: memref<1xi32, #tpu.memory_space<smem>>) -> (i32, i32) {
    %c0_i32 = arith.constant 0 : i32
    %c0_i32_0 = arith.constant 0 : i32
    return %arg0, %c0_i32 : i32, i32
  }
  func.func @transform_1(%arg0: i32, %arg1: memref<1xi32, #tpu.memory_space<smem>>) -> (i32, i32, i32) {
    %c0 = arith.constant 0 : index
    %0 = memref.load %arg1[%c0] : memref<1xi32, #tpu.memory_space<smem>>
    %c0_i32 = arith.constant 0 : i32
    %c0_i32_0 = arith.constant 0 : i32
    %c0_i32_1 = arith.constant 0 : i32
    return %0, %c0_i32, %c0_i32_0 : i32, i32, i32
  }
  func.func @transform_2(%arg0: i32, %arg1: memref<1xi32, #tpu.memory_space<smem>>) -> (i32, i32, i32) {
    %c0 = arith.constant 0 : index
    %0 = memref.load %arg1[%c0] : memref<1xi32, #tpu.memory_space<smem>>
    %c0_i32 = arith.constant 0 : i32
    %c0_i32_0 = arith.constant 0 : i32
    %c0_i32_1 = arith.constant 0 : i32
    return %0, %c0_i32, %c0_i32_0 : i32, i32, i32
  }
  func.func @transform_3(%arg0: i32, %arg1: memref<1xi32, #tpu.memory_space<smem>>) -> (i32, i32, i32) {
    %c0 = arith.constant 0 : index
    %0 = memref.load %arg1[%c0] : memref<1xi32, #tpu.memory_space<smem>>
    %c0_i32 = arith.constant 0 : i32
    %c0_i32_0 = arith.constant 0 : i32
    %c0_i32_1 = arith.constant 0 : i32
    return %0, %c0_i32, %c0_i32_0 : i32, i32, i32
  }
  func.func @transform_4(%arg0: i32, %arg1: memref<1xi32, #tpu.memory_space<smem>>) -> (i32, i32, i32) {
    %c0 = arith.constant 0 : index
    %0 = memref.load %arg1[%c0] : memref<1xi32, #tpu.memory_space<smem>>
    %c0_i32 = arith.constant 0 : i32
    %c0_i32_0 = arith.constant 0 : i32
    %c0_i32_1 = arith.constant 0 : i32
    return %0, %c0_i32, %c0_i32_0 : i32, i32, i32
  }
  func.func @transform_5(%arg0: i32, %arg1: memref<1xi32, #tpu.memory_space<smem>>) -> (i32, i32) {
    %c0_i32 = arith.constant 0 : i32
    %c0_i32_0 = arith.constant 0 : i32
    return %arg0, %c0_i32 : i32, i32
  }
}

</mosaic_0001>

<llo_original>
// kernel: model_bn_forward.1
$region0: #{model_bn_forward.1}
  #allocation0 [shape = 'u32[]', space=smem, size = 0x4, offset = 0x4, fixed_abs, tag = 'smem constant byte address 0x4 - core index']
  #allocation1 [shape = 'u32[72,128]{1,0:T(1,128)}', space=vmem, size = 0x9000, scoped, tag = 'internal scratch']
  #allocation2 [shape = 's32[1]{0}', space=sflag, size = 0x4, scoped, tag = 'scoped memory for model_bn_forward.1']
  #allocation3 [shape = 's32[1]{0:T(128)S(6)}', space=smem, size = 0x200, scoped, tag = 'prefetched SMEM operand 0']
  %s0 = inlined_call_operand.<no memory space> [shape: s32[1], index: 0, kind: input, shape index: {}]
  %s1 = inlined_call_operand.vmem [shape: f32[8,512], index: 1, kind: input, shape index: {}]
  %s2 = inlined_call_operand.hbm [shape: bf16[10,512,256], index: 2, kind: input, shape index: {}]
  %s3 = inlined_call_operand.hbm [shape: bf16[10,256,256], index: 3, kind: input, shape index: {}]
  %s4 = inlined_call_operand.hbm [shape: bf16[10,256,128], index: 4, kind: input, shape index: {}]
  %s5 = inlined_call_operand.hbm [shape: f32[10,8,256], index: 5, kind: input, shape index: {}]
  %s6 = inlined_call_operand.hbm [shape: f32[8,128], index: 6, kind: output, shape index: {}]
  %s7 = sld [smem:[#allocation0]]
  $region46: #{model_bn_forward.1} parent=0
    _
  %s9 = ssub.s32 1, %s7
  %s10 = scalar_select 0, %s9, %s7
  %11 = sst [smem:[#allocation3]] %s0
  $region1: #{model_bn_forward.1} parent=0
    #allocation4 [shape = 'u8[262144]{0}', space=vmem, size = 0x40000, scoped, tag = 'input window, operand 2, single buffered']
    #allocation5 [shape = 's32[1]{0}', space=sflag, size = 0x4, scoped, tag = 'scoped memory for model_bn_forward.1']
    #allocation6 [shape = 's32[1]{0}', space=sflag, size = 0x4, scoped, tag = 'scoped memory for model_bn_forward.1']
    #allocation7 [shape = 'u8[131072]{0}', space=vmem, size = 0x20000, scoped, tag = 'input window, operand 3, single buffered']
    #allocation8 [shape = 's32[1]{0}', space=sflag, size = 0x4, scoped, tag = 'scoped memory for model_bn_forward.1']
    #allocation9 [shape = 'u8[65536]{0}', space=vmem, size = 0x10000, scoped, tag = 'input window, operand 4, single buffered']
    #allocation10 [shape = 'u8[8192]{0}', space=vmem, size = 0x2000, scoped, tag = 'input window, operand 5, single buffered']
    #allocation11 [shape = 's32[1]{0}', space=sflag, size = 0x4, scoped, tag = 'scoped memory for model_bn_forward.1']
    #allocation12 [shape = 'u8[4096]{0}', space=vmem, size = 0x1000, scoped, tag = 'output window, operand 0, single buffered']
    %12 = vsyncpa [#allocation5], 0
    %13 = vsyncpa [#allocation8], 0
    %14 = vsyncpa [#allocation11], 0
    %15 = vsyncpa [#allocation6], 0
    // Predicated region
    $region2: #{model_bn_forward.1} parent=1 // pred_check
      _
    $region3: #{model_bn_forward.1} parent=1 // pred_check_branch
      %17 = sbr.rel (0) target = $region5
    $region4: #{model_bn_forward.1} parent=1 // pred_region
      _
    $region5: #{model_bn_forward.1} parent=1 // pred_fallthru
      _
    // Predicated region
    $region6: #{model_bn_forward.1} parent=1 // pred_check
      _
    $region7: #{model_bn_forward.1} parent=1 // pred_check_branch
      %19 = sbr.rel (0) target = $region9
    $region8: #{model_bn_forward.1} parent=1 // pred_region
      %s20 = sld [smem:[#allocation3]]
      %22 = vsyncadd [#allocation5], 0
      %s23 = smul.addr %s20, 128
      %s24 = smul.addr %s23, 4
      %s25 = scalar_lea.hbm %s2, %s24
      %s26 = sshll.u32 %s25, 4
      %s27 = int_to_ptr.hbm [resolvable:$true] %s26
      %s28 = sshll.u32 [#allocation4], 4
      %s29 = int_to_ptr.vmem [resolvable:$true] %s28
      %34 = dma.hbm_to_vmem [thread:$0]  %s27, 8192, %s29, [#allocation5], 128, 128, 8
    $region9: #{model_bn_forward.1} parent=1 // pred_fallthru
      _
    // Predicated region
    $region10: #{model_bn_forward.1} parent=1 // pred_check
      _
    $region11: #{model_bn_forward.1} parent=1 // pred_check_branch
      %36 = sbr.rel (0) target = $region13
    $region12: #{model_bn_forward.1} parent=1 // pred_region
      %s37 = sld [smem:[#allocation3]]
      %39 = vsyncadd [#allocation8], 0
      %s40 = smul.addr %s37, 64
      %s41 = smul.addr %s40, 4
      %s42 = scalar_lea.hbm %s3, %s41
      %s43 = sshll.u32 %s42, 4
      %s44 = int_to_ptr.hbm [resolvable:$true] %s43
      %s45 = sshll.u32 [#allocation7], 4
      %s46 = int_to_ptr.vmem [resolvable:$true] %s45
      %51 = dma.hbm_to_vmem [thread:$0]  %s44, 4096, %s46, [#allocation8], 128, 128, 8
    $region13: #{model_bn_forward.1} parent=1 // pred_fallthru
      _
    // Predicated region
    $region14: #{model_bn_forward.1} parent=1 // pred_check
      _
    $region15: #{model_bn_forward.1} parent=1 // pred_check_branch
      %53 = sbr.rel (0) target = $region17
    $region16: #{model_bn_forward.1} parent=1 // pred_region
      %s54 = sld [smem:[#allocation3]]
      %56 = vsyncadd [#allocation8], 0
      %s57 = smul.addr %s54, 32
      %s58 = smul.addr %s57, 4
      %s59 = scalar_lea.hbm %s4, %s58
      %s60 = sshll.u32 %s59, 4
      %s61 = int_to_ptr.hbm [resolvable:$true] %s60
      %s62 = sshll.u32 [#allocation9], 4
      %s63 = int_to_ptr.vmem [resolvable:$true] %s62
      %68 = dma.hbm_to_vmem [thread:$0]  %s61, 2048, %s63, [#allocation8], 64, 64, 4
    $region17: #{model_bn_forward.1} parent=1 // pred_fallthru
      _
    // Predicated region
    $region18: #{model_bn_forward.1} parent=1 // pred_check
      _
    $region19: #{model_bn_forward.1} parent=1 // pred_check_branch
      %70 = sbr.rel (0) target = $region21
    $region20: #{model_bn_forward.1} parent=1 // pred_region
      %s71 = sld [smem:[#allocation3]]
      %73 = vsyncadd [#allocation11], 0
      %s74 = smul.addr %s71, 2
      %s75 = smul.addr %s74, 8
      %s76 = scalar_lea.hbm %s5, %s75
      %s78 = sshll.u32 %s76, 4
      %s79 = int_to_ptr.hbm [resolvable:$true] %s78
      %s80 = sshll.u32 [#allocation10], 4
      %s81 = int_to_ptr.vmem [resolvable:$true] %s80
      %83 = dma.hbm_to_vmem [thread:$0]  %s79, 256, %s81, [#allocation11]
    $region21: #{model_bn_forward.1} parent=1 // pred_fallthru
      _
    // Predicated region
    $region22: #{model_bn_forward.1} parent=1 // pred_check
      _
    $region23: #{model_bn_forward.1} parent=1 // pred_check_branch
      %85 = sbr.rel (0) target = $region25
    $region24: #{model_bn_forward.1} parent=1 // pred_region
      %87 = dma.done [#allocation5], 8192
    $region25: #{model_bn_forward.1} parent=1 // pred_fallthru
      _
    // Predicated region
    $region26: #{model_bn_forward.1} parent=1 // pred_check
      _
    $region27: #{model_bn_forward.1} parent=1 // pred_check_branch
      %89 = sbr.rel (0) target = $region29
    $region28: #{model_bn_forward.1} parent=1 // pred_region
      %91 = dma.done [#allocation8], 4096
    $region29: #{model_bn_forward.1} parent=1 // pred_fallthru
      _
    // Predicated region
    $region30: #{model_bn_forward.1} parent=1 // pred_check
      _
    $region31: #{model_bn_forward.1} parent=1 // pred_check_branch
      %93 = sbr.rel (0) target = $region33
    $region32: #{model_bn_forward.1} parent=1 // pred_region
      %95 = dma.done [#allocation8], 2048
    $region33: #{model_bn_forward.1} parent=1 // pred_fallthru
      _
    // Predicated region
    $region34: #{model_bn_forward.1} parent=1 // pred_check
      _
    $region35: #{model_bn_forward.1} parent=1 // pred_check_branch
      %97 = sbr.rel (0) target = $region37
    $region36: #{model_bn_forward.1} parent=1 // pred_region
      %99 = dma.done [#allocation11], 256
    $region37: #{model_bn_forward.1} parent=1 // pred_fallthru
      _
    %s100 = sld [smem:[#allocation3]]
    %s101 = sld [smem:[#allocation3]]
    %s102 = sld [smem:[#allocation3]]
    %s103 = sld [smem:[#allocation3]]
    %v104 = vld [vmem:[#allocation10] ss:$8 sm:$0x3]
    %s105 = scalar_lea.vmem [#allocation10], 1
    %v106 = vld [vmem:[%s105] ss:$8 sm:$0x3]
    %v107 = vld [vmem:[#allocation10 + $0x2] ss:$0 sm:$0xff]
    %v108 = vld [vmem:[%s1] sm:$0xff]
    %v109 = vld [vmem:[%s1 + $0x8] sm:$0xff]
    %v110 = vld [vmem:[%s1 + $0x10] sm:$0xff]
    %v111 = vld [vmem:[%s1 + $0x18] sm:$0xff]
    %v112 = vpack.c.bf16 %v108, %v108
    %v113 = vpack.c.bf16 %v109, %v109
    %v114 = vpack.c.bf16 %v110, %v110
    %v115 = vpack.c.bf16 %v111, %v111
    %v116 = vld [vmem:[#allocation4] sm:$0xff]
    %v117 = vld [vmem:[#allocation4 + $0x8] sm:$0xff]
    %v118 = vld [vmem:[#allocation4 + $0x10] sm:$0xff]
    %v119 = vld [vmem:[#allocation4 + $0x18] sm:$0xff]
    %v120 = vld [vmem:[#allocation4 + $0x20] sm:$0xff]
    %v121 = vld [vmem:[#allocation4 + $0x28] sm:$0xff]
    %v122 = vld [vmem:[#allocation4 + $0x30] sm:$0xff]
    %v123 = vld [vmem:[#allocation4 + $0x38] sm:$0xff]
    %v124 = vld [vmem:[#allocation4 + $0x40] sm:$0xff]
    %v125 = vld [vmem:[#allocation4 + $0x48] sm:$0xff]
    %v126 = vld [vmem:[#allocation4 + $0x50] sm:$0xff]
    %v127 = vld [vmem:[#allocation4 + $0x58] sm:$0xff]
    %v128 = vld [vmem:[#allocation4 + $0x60] sm:$0xff]
    %v129 = vld [vmem:[#allocation4 + $0x68] sm:$0xff]
    %v130 = vld [vmem:[#allocation4 + $0x70] sm:$0xff]
    %v131 = vld [vmem:[#allocation4 + $0x78] sm:$0xff]
    %v132 = vld [vmem:[#allocation4 + $0x80] sm:$0xff]
    %v133 = vld [vmem:[#allocation4 + $0x88] sm:$0xff]
    %v134 = vld [vmem:[#allocation4 + $0x90] sm:$0xff]
    %v135 = vld [vmem:[#allocation4 + $0x98] sm:$0xff]
    %v136 = vld [vmem:[#allocation4 + $0xa0] sm:$0xff]
    %v137 = vld [vmem:[#allocation4 + $0xa8] sm:$0xff]
    %v138 = vld [vmem:[#allocation4 + $0xb0] sm:$0xff]
    %v139 = vld [vmem:[#allocation4 + $0xb8] sm:$0xff]
    %v140 = vld [vmem:[#allocation4 + $0xc0] sm:$0xff]
    %v141 = vld [vmem:[#allocation4 + $0xc8] sm:$0xff]
    %v142 = vld [vmem:[#allocation4 + $0xd0] sm:$0xff]
    %v143 = vld [vmem:[#allocation4 + $0xd8] sm:$0xff]
    %v144 = vld [vmem:[#allocation4 + $0xe0] sm:$0xff]
    %v145 = vld [vmem:[#allocation4 + $0xe8] sm:$0xff]
    %v146 = vld [vmem:[#allocation4 + $0xf0] sm:$0xff]
    %v147 = vld [vmem:[#allocation4 + $0xf8] sm:$0xff]
    %v148 = vld [vmem:[#allocation4 + $0x100] sm:$0xff]
    %v149 = vld [vmem:[#allocation4 + $0x108] sm:$0xff]
    %v150 = vld [vmem:[#allocation4 + $0x110] sm:$0xff]
    %v151 = vld [vmem:[#allocation4 + $0x118] sm:$0xff]
    %v152 = vld [vmem:[#allocation4 + $0x120] sm:$0xff]
    %v153 = vld [vmem:[#allocation4 + $0x128] sm:$0xff]
    %v154 = vld [vmem:[#allocation4 + $0x130] sm:$0xff]
    %v155 = vld [vmem:[#allocation4 + $0x138] sm:$0xff]
    %v156 = vld [vmem:[#allocation4 + $0x140] sm:$0xff]
    %v157 = vld [vmem:[#allocation4 + $0x148] sm:$0xff]
    %v158 = vld [vmem:[#allocation4 + $0x150] sm:$0xff]
    %v159 = vld [vmem:[#allocation4 + $0x158] sm:$0xff]
    %v160 = vld [vmem:[#allocation4 + $0x160] sm:$0xff]
    %v161 = vld [vmem:[#allocation4 + $0x168] sm:$0xff]
    %v162 = vld [vmem:[#allocation4 + $0x170] sm:$0xff]
    %v163 = vld [vmem:[#allocation4 + $0x178] sm:$0xff]
    %v164 = vld [vmem:[#allocation4 + $0x180] sm:$0xff]
    %v165 = vld [vmem:[#allocation4 + $0x188] sm:$0xff]
    %v166 = vld [vmem:[#allocation4 + $0x190] sm:$0xff]
    %v167 = vld [vmem:[#allocation4 + $0x198] sm:$0xff]
    %v168 = vld [vmem:[#allocation4 + $0x1a0] sm:$0xff]
    %v169 = vld [vmem:[#allocation4 + $0x1a8] sm:$0xff]
    %v170 = vld [vmem:[#allocation4 + $0x1b0] sm:$0xff]
    %v171 = vld [vmem:[#allocation4 + $0x1b8] sm:$0xff]
    %v172 = vld [vmem:[#allocation4 + $0x1c0] sm:$0xff]
    %v173 = vld [vmem:[#allocation4 + $0x1c8] sm:$0xff]
    %v174 = vld [vmem:[#allocation4 + $0x1d0] sm:$0xff]
    %v175 = vld [vmem:[#allocation4 + $0x1d8] sm:$0xff]
    %v176 = vld [vmem:[#allocation4 + $0x1e0] sm:$0xff]
    %v177 = vld [vmem:[#allocation4 + $0x1e8] sm:$0xff]
    %v178 = vld [vmem:[#allocation4 + $0x1f0] sm:$0xff]
    %v179 = vld [vmem:[#allocation4 + $0x1f8] sm:$0xff]
    %v181 = vperm.slane %v104, 0
    %v182 = vperm.slane %v104, 1
    %v249 = vunpack.c.l.b16 %v116
    %v250 = vunpack.c.h.b16 %v116
    %v251 = vunpack.c.l.b16 %v117
    %v252 = vunpack.c.h.b16 %v117
    %v253 = vunpack.c.l.b16 %v118
    %v254 = vunpack.c.h.b16 %v118
    %v255 = vunpack.c.l.b16 %v119
    %v256 = vunpack.c.h.b16 %v119
    %v257 = vunpack.c.l.b16 %v120
    %v258 = vunpack.c.h.b16 %v120
    %v259 = vunpack.c.l.b16 %v121
    %v260 = vunpack.c.h.b16 %v121
    %v261 = vunpack.c.l.b16 %v122
    %v262 = vunpack.c.h.b16 %v122
    %v263 = vunpack.c.l.b16 %v123
    %v264 = vunpack.c.h.b16 %v123
    %v265 = vunpack.c.l.b16 %v124
    %v266 = vunpack.c.h.b16 %v124
    %v267 = vunpack.c.l.b16 %v125
    %v268 = vunpack.c.h.b16 %v125
    %v269 = vunpack.c.l.b16 %v126
    %v270 = vunpack.c.h.b16 %v126
    %v271 = vunpack.c.l.b16 %v127
    %v272 = vunpack.c.h.b16 %v127
    %v273 = vunpack.c.l.b16 %v128
    %v274 = vunpack.c.h.b16 %v128
    %v275 = vunpack.c.l.b16 %v129
    %v276 = vunpack.c.h.b16 %v129
    %v277 = vunpack.c.l.b16 %v130
    %v278 = vunpack.c.h.b16 %v130
    %v279 = vunpack.c.l.b16 %v131
    %v280 = vunpack.c.h.b16 %v131
    %v281 = vunpack.c.l.b16 %v132
    %v282 = vunpack.c.h.b16 %v132
    %v283 = vunpack.c.l.b16 %v133
    %v284 = vunpack.c.h.b16 %v133
    %v285 = vunpack.c.l.b16 %v134
    %v286 = vunpack.c.h.b16 %v134
    %v287 = vunpack.c.l.b16 %v135
    %v288 = vunpack.c.h.b16 %v135
    %v289 = vunpack.c.l.b16 %v136
    %v290 = vunpack.c.h.b16 %v136
    %v291 = vunpack.c.l.b16 %v137
    %v292 = vunpack.c.h.b16 %v137
    %v293 = vunpack.c.l.b16 %v138
    %v294 = vunpack.c.h.b16 %v138
    %v295 = vunpack.c.l.b16 %v139
    %v296 = vunpack.c.h.b16 %v139
    %v297 = vunpack.c.l.b16 %v140
    %v298 = vunpack.c.h.b16 %v140
    %v299 = vunpack.c.l.b16 %v141
    %v300 = vunpack.c.h.b16 %v141
    %v301 = vunpack.c.l.b16 %v142
    %v302 = vunpack.c.h.b16 %v142
    %v303 = vunpack.c.l.b16 %v143
    %v304 = vunpack.c.h.b16 %v143
    %v305 = vunpack.c.l.b16 %v144
    %v306 = vunpack.c.h.b16 %v144
    %v307 = vunpack.c.l.b16 %v145
    %v308 = vunpack.c.h.b16 %v145
    %v309 = vunpack.c.l.b16 %v146
    %v310 = vunpack.c.h.b16 %v146
    %v311 = vunpack.c.l.b16 %v147
    %v312 = vunpack.c.h.b16 %v147
    %v313 = vunpack.c.l.b16 %v148
    %v314 = vunpack.c.h.b16 %v148
    %v315 = vunpack.c.l.b16 %v149
    %v316 = vunpack.c.h.b16 %v149
    %v317 = vunpack.c.l.b16 %v150
    %v318 = vunpack.c.h.b16 %v150
    %v319 = vunpack.c.l.b16 %v151
    %v320 = vunpack.c.h.b16 %v151
    %v321 = vunpack.c.l.b16 %v152
    %v322 = vunpack.c.h.b16 %v152
    %v323 = vunpack.c.l.b16 %v153
    %v324 = vunpack.c.h.b16 %v153
    %v325 = vunpack.c.l.b16 %v154
    %v326 = vunpack.c.h.b16 %v154
    %v327 = vunpack.c.l.b16 %v155
    %v328 = vunpack.c.h.b16 %v155
    %v329 = vunpack.c.l.b16 %v156
    %v330 = vunpack.c.h.b16 %v156
    %v331 = vunpack.c.l.b16 %v157
    %v332 = vunpack.c.h.b16 %v157
    %v333 = vunpack.c.l.b16 %v158
    %v334 = vunpack.c.h.b16 %v158
    %v335 = vunpack.c.l.b16 %v159
    %v336 = vunpack.c.h.b16 %v159
    %v337 = vunpack.c.l.b16 %v160
    %v338 = vunpack.c.h.b16 %v160
    %v339 = vunpack.c.l.b16 %v161
    %v340 = vunpack.c.h.b16 %v161
    %v341 = vunpack.c.l.b16 %v162
    %v342 = vunpack.c.h.b16 %v162
    %v343 = vunpack.c.l.b16 %v163
    %v344 = vunpack.c.h.b16 %v163
    %v345 = vunpack.c.l.b16 %v164
    %v346 = vunpack.c.h.b16 %v164
    %v347 = vunpack.c.l.b16 %v165
    %v348 = vunpack.c.h.b16 %v165
    %v349 = vunpack.c.l.b16 %v166
    %v350 = vunpack.c.h.b16 %v166
    %v351 = vunpack.c.l.b16 %v167
    %v352 = vunpack.c.h.b16 %v167
    %v353 = vunpack.c.l.b16 %v168
    %v354 = vunpack.c.h.b16 %v168
    %v355 = vunpack.c.l.b16 %v169
    %v356 = vunpack.c.h.b16 %v169
    %v357 = vunpack.c.l.b16 %v170
    %v358 = vunpack.c.h.b16 %v170
    %v359 = vunpack.c.l.b16 %v171
    %v360 = vunpack.c.h.b16 %v171
    %v361 = vunpack.c.l.b16 %v172
    %v362 = vunpack.c.h.b16 %v172
    %v363 = vunpack.c.l.b16 %v173
    %v364 = vunpack.c.h.b16 %v173
    %v365 = vunpack.c.l.b16 %v174
    %v366 = vunpack.c.h.b16 %v174
    %v367 = vunpack.c.l.b16 %v175
    %v368 = vunpack.c.h.b16 %v175
    %v369 = vunpack.c.l.b16 %v176
    %v370 = vunpack.c.h.b16 %v176
    %v371 = vunpack.c.l.b16 %v177
    %v372 = vunpack.c.h.b16 %v177
    %v373 = vunpack.c.l.b16 %v178
    %v374 = vunpack.c.h.b16 %v178
    %v375 = vunpack.c.l.b16 %v179
    %v376 = vunpack.c.h.b16 %v179
    %v377 = vpack.c.b16 %v251, %v249
    %v378 = vpack.c.b16 %v252, %v250
    %v379 = vpack.c.b16 %v255, %v253
    %v380 = vpack.c.b16 %v256, %v254
    %v381 = vpack.c.b16 %v259, %v257
    %v382 = vpack.c.b16 %v260, %v258
    %v383 = vpack.c.b16 %v263, %v261
    %v384 = vpack.c.b16 %v264, %v262
    %v385 = vpack.c.b16 %v267, %v265
    %v386 = vpack.c.b16 %v268, %v266
    %v387 = vpack.c.b16 %v271, %v269
    %v388 = vpack.c.b16 %v272, %v270
    %v389 = vpack.c.b16 %v275, %v273
    %v390 = vpack.c.b16 %v276, %v274
    %v391 = vpack.c.b16 %v279, %v277
    %v392 = vpack.c.b16 %v280, %v278
    %v393 = vpack.c.b16 %v283, %v281
    %v394 = vpack.c.b16 %v284, %v282
    %v395 = vpack.c.b16 %v287, %v285
    %v396 = vpack.c.b16 %v288, %v286
    %v397 = vpack.c.b16 %v291, %v289
    %v398 = vpack.c.b16 %v292, %v290
    %v399 = vpack.c.b16 %v295, %v293
    %v400 = vpack.c.b16 %v296, %v294
    %v401 = vpack.c.b16 %v299, %v297
    %v402 = vpack.c.b16 %v300, %v298
    %v403 = vpack.c.b16 %v303, %v301
    %v404 = vpack.c.b16 %v304, %v302
    %v405 = vpack.c.b16 %v307, %v305
    %v406 = vpack.c.b16 %v308, %v306
    %v407 = vpack.c.b16 %v311, %v309
    %v408 = vpack.c.b16 %v312, %v310
    %v409 = vpack.c.b16 %v315, %v313
    %v410 = vpack.c.b16 %v316, %v314
    %v411 = vpack.c.b16 %v319, %v317
    %v412 = vpack.c.b16 %v320, %v318
    %v413 = vpack.c.b16 %v323, %v321
    %v414 = vpack.c.b16 %v324, %v322
    %v415 = vpack.c.b16 %v327, %v325
    %v416 = vpack.c.b16 %v328, %v326
    %v417 = vpack.c.b16 %v331, %v329
    %v418 = vpack.c.b16 %v332, %v330
    %v419 = vpack.c.b16 %v335, %v333
    %v420 = vpack.c.b16 %v336, %v334
    %v421 = vpack.c.b16 %v339, %v337
    %v422 = vpack.c.b16 %v340, %v338
    %v423 = vpack.c.b16 %v343, %v341
    %v424 = vpack.c.b16 %v344, %v342
    %v425 = vpack.c.b16 %v347, %v345
    %v426 = vpack.c.b16 %v348, %v346
    %v427 = vpack.c.b16 %v351, %v349
    %v428 = vpack.c.b16 %v352, %v350
    %v429 = vpack.c.b16 %v355, %v353
    %v430 = vpack.c.b16 %v356, %v354
    %v431 = vpack.c.b16 %v359, %v357
    %v432 = vpack.c.b16 %v360, %v358
    %v433 = vpack.c.b16 %v363, %v361
    %v434 = vpack.c.b16 %v364, %v362
    %v435 = vpack.c.b16 %v367, %v365
    %v436 = vpack.c.b16 %v368, %v366
    %v437 = vpack.c.b16 %v371, %v369
    %v438 = vpack.c.b16 %v372, %v370
    %v439 = vpack.c.b16 %v375, %v373
    %v440 = vpack.c.b16 %v376, %v374
    %505 = vmatpush.bf16.msra.mxu0 %v391
    %506 = vmatpush.bf16.msra.mxu0 %v389
    %507 = vmatpush.bf16.msra.mxu0 %v387
    %508 = vmatpush.bf16.msra.mxu0 %v385
    %509 = vmatpush.bf16.msra.mxu0 %v383
    %510 = vmatpush.bf16.msra.mxu0 %v381
    %511 = vmatpush.bf16.msra.mxu0 %v379
    %512 = vmatpush.bf16.msra.mxu0 %v377
    %513 = vmatmul.bf16.gmra.mxu0 %v112
    %v514 = vpop.f32.mrf.mxu0
    %v515 = vadd.f32 %v181, %v514
    %v516 = vpop.f32.mrf.mxu0
    %517 = vdwg.mxu0
    %518 = vmatpush.bf16.msra.mxu0 %v407
    %519 = vmatpush.bf16.msra.mxu0 %v405
    %520 = vmatpush.bf16.msra.mxu0 %v403
    %521 = vmatpush.bf16.msra.mxu0 %v401
    %522 = vmatpush.bf16.msra.mxu0 %v399
    %523 = vmatpush.bf16.msra.mxu0 %v397
    %524 = vmatpush.bf16.msra.mxu0 %v395
    %525 = vmatpush.bf16.msra.mxu0 %v393
    %526 = vmatmul.bf16.gmra.mxu0 %v113
    %v527 = vpop.f32.mrf.mxu0
    %v528 = vadd.f32 %v515, %v527
    %v529 = vpop.f32.mrf.mxu0
    %530 = vdwg.mxu0
    %531 = vmatpush.bf16.msra.mxu0 %v423
    %532 = vmatpush.bf16.msra.mxu0 %v421
    %533 = vmatpush.bf16.msra.mxu0 %v419
    %534 = vmatpush.bf16.msra.mxu0 %v417
    %535 = vmatpush.bf16.msra.mxu0 %v415
    %536 = vmatpush.bf16.msra.mxu0 %v413
    %537 = vmatpush.bf16.msra.mxu0 %v411
    %538 = vmatpush.bf16.msra.mxu0 %v409
    %539 = vmatmul.bf16.gmra.mxu0 %v114
    %v540 = vpop.f32.mrf.mxu0
    %v541 = vadd.f32 %v528, %v540
    %v542 = vpop.f32.mrf.mxu0
    %543 = vdwg.mxu0
    %544 = vmatpush.bf16.msra.mxu0 %v439
    %545 = vmatpush.bf16.msra.mxu0 %v437
    %546 = vmatpush.bf16.msra.mxu0 %v435
    %547 = vmatpush.bf16.msra.mxu0 %v433
    %548 = vmatpush.bf16.msra.mxu0 %v431
    %549 = vmatpush.bf16.msra.mxu0 %v429
    %550 = vmatpush.bf16.msra.mxu0 %v427
    %551 = vmatpush.bf16.msra.mxu0 %v425
    %552 = vmatmul.bf16.gmra.mxu0 %v115
    %v553 = vpop.f32.mrf.mxu0
    %v554 = vadd.f32 %v541, %v553
    %v555 = vpop.f32.mrf.mxu0
    %556 = vdwg.mxu0
    %557 = vmatpush.bf16.msra.mxu0 %v392
    %558 = vmatpush.bf16.msra.mxu0 %v390
    %559 = vmatpush.bf16.msra.mxu0 %v388
    %560 = vmatpush.bf16.msra.mxu0 %v386
    %561 = vmatpush.bf16.msra.mxu0 %v384
    %562 = vmatpush.bf16.msra.mxu0 %v382
    %563 = vmatpush.bf16.msra.mxu0 %v380
    %564 = vmatpush.bf16.msra.mxu0 %v378
    %565 = vmatmul.bf16.gmra.mxu0 %v112
    %v566 = vpop.f32.mrf.mxu0
    %v567 = vadd.f32 %v182, %v566
    %v568 = vpop.f32.mrf.mxu0
    %569 = vdwg.mxu0
    %570 = vmatpush.bf16.msra.mxu0 %v408
    %571 = vmatpush.bf16.msra.mxu0 %v406
    %572 = vmatpush.bf16.msra.mxu0 %v404
    %573 = vmatpush.bf16.msra.mxu0 %v402
    %574 = vmatpush.bf16.msra.mxu0 %v400
    %575 = vmatpush.bf16.msra.mxu0 %v398
    %576 = vmatpush.bf16.msra.mxu0 %v396
    %577 = vmatpush.bf16.msra.mxu0 %v394
    %578 = vmatmul.bf16.gmra.mxu0 %v113
    %v579 = vpop.f32.mrf.mxu0
    %v580 = vadd.f32 %v567, %v579
    %v581 = vpop.f32.mrf.mxu0
    %582 = vdwg.mxu0
    %583 = vmatpush.bf16.msra.mxu0 %v424
    %584 = vmatpush.bf16.msra.mxu0 %v422
    %585 = vmatpush.bf16.msra.mxu0 %v420
    %586 = vmatpush.bf16.msra.mxu0 %v418
    %587 = vmatpush.bf16.msra.mxu0 %v416
    %588 = vmatpush.bf16.msra.mxu0 %v414
    %589 = vmatpush.bf16.msra.mxu0 %v412
    %590 = vmatpush.bf16.msra.mxu0 %v410
    %591 = vmatmul.bf16.gmra.mxu0 %v114
    %v592 = vpop.f32.mrf.mxu0
    %v593 = vadd.f32 %v580, %v592
    %v594 = vpop.f32.mrf.mxu0
    %595 = vdwg.mxu0
    %596 = vmatpush.bf16.msra.mxu0 %v440
    %597 = vmatpush.bf16.msra.mxu0 %v438
    %598 = vmatpush.bf16.msra.mxu0 %v436
    %599 = vmatpush.bf16.msra.mxu0 %v434
    %600 = vmatpush.bf16.msra.mxu0 %v432
    %601 = vmatpush.bf16.msra.mxu0 %v430
    %602 = vmatpush.bf16.msra.mxu0 %v428
    %603 = vmatpush.bf16.msra.mxu0 %v426
    %604 = vmatmul.bf16.gmra.mxu0 %v115
    %v605 = vpop.f32.mrf.mxu0
    %v606 = vadd.f32 %v593, %v605
    %v607 = vpop.f32.mrf.mxu0
    %608 = vdwg.mxu0
    %vm609 = vcmp.ge.f32.partialorder %v554, 0.0
    %vm610 = vcmp.ge.f32.partialorder %v606, 0.0
    %v611 = vmul.f32 %v554, 0.2
    %v612 = vmul.f32 %v606, 0.2
    %v613 = vsel %vm609, %v554, %v611
    %v614 = vsel %vm610, %v606, %v612
    %v615 = vpack.c.bf16 %v613, %v613
    %v616 = vpack.c.bf16 %v614, %v614
    %v617 = vld [vmem:[#allocation7] sm:$0xff]
    %v618 = vld [vmem:[#allocation7 + $0x8] sm:$0xff]
    %v619 = vld [vmem:[#allocation7 + $0x10] sm:$0xff]
    %v620 = vld [vmem:[#allocation7 + $0x18] sm:$0xff]
    %v621 = vld [vmem:[#allocation7 + $0x20] sm:$0xff]
    %v622 = vld [vmem:[#allocation7 + $0x28] sm:$0xff]
    %v623 = vld [vmem:[#allocation7 + $0x30] sm:$0xff]
    %v624 = vld [vmem:[#allocation7 + $0x38] sm:$0xff]
    %v625 = vld [vmem:[#allocation7 + $0x40] sm:$0xff]
    %v626 = vld [vmem:[#allocation7 + $0x48] sm:$0xff]
    %v627 = vld [vmem:[#allocation7 + $0x50] sm:$0xff]
    %v628 = vld [vmem:[#allocation7 + $0x58] sm:$0xff]
    %v629 = vld [vmem:[#allocation7 + $0x60] sm:$0xff]
    %v630 = vld [vmem:[#allocation7 + $0x68] sm:$0xff]
    %v631 = vld [vmem:[#allocation7 + $0x70] sm:$0xff]
    %v632 = vld [vmem:[#allocation7 + $0x78] sm:$0xff]
    %v633 = vld [vmem:[#allocation7 + $0x80] sm:$0xff]
    %v634 = vld [vmem:[#allocation7 + $0x88] sm:$0xff]
    %v635 = vld [vmem:[#allocation7 + $0x90] sm:$0xff]
    %v636 = vld [vmem:[#allocation7 + $0x98] sm:$0xff]
    %v637 = vld [vmem:[#allocation7 + $0xa0] sm:$0xff]
    %v638 = vld [vmem:[#allocation7 + $0xa8] sm:$0xff]
    %v639 = vld [vmem:[#allocation7 + $0xb0] sm:$0xff]
    %v640 = vld [vmem:[#allocation7 + $0xb8] sm:$0xff]
    %v641 = vld [vmem:[#allocation7 + $0xc0] sm:$0xff]
    %v642 = vld [vmem:[#allocation7 + $0xc8] sm:$0xff]
    %v643 = vld [vmem:[#allocation7 + $0xd0] sm:$0xff]
    %v644 = vld [vmem:[#allocation7 + $0xd8] sm:$0xff]
    %v645 = vld [vmem:[#allocation7 + $0xe0] sm:$0xff]
    %v646 = vld [vmem:[#allocation7 + $0xe8] sm:$0xff]
    %v647 = vld [vmem:[#allocation7 + $0xf0] sm:$0xff]
    %v648 = vld [vmem:[#allocation7 + $0xf8] sm:$0xff]
    %v650 = vperm.slane %v106, 0
    %v651 = vperm.slane %v106, 1
    %v686 = vunpack.c.l.b16 %v617
    %v687 = vunpack.c.h.b16 %v617
    %v688 = vunpack.c.l.b16 %v618
    %v689 = vunpack.c.h.b16 %v618
    %v690 = vunpack.c.l.b16 %v619
    %v691 = vunpack.c.h.b16 %v619
    %v692 = vunpack.c.l.b16 %v620
    %v693 = vunpack.c.h.b16 %v620
    %v694 = vunpack.c.l.b16 %v621
    %v695 = vunpack.c.h.b16 %v621
    %v696 = vunpack.c.l.b16 %v622
    %v697 = vunpack.c.h.b16 %v622
    %v698 = vunpack.c.l.b16 %v623
    %v699 = vunpack.c.h.b16 %v623
    %v700 = vunpack.c.l.b16 %v624
    %v701 = vunpack.c.h.b16 %v624
    %v702 = vunpack.c.l.b16 %v625
    %v703 = vunpack.c.h.b16 %v625
    %v704 = vunpack.c.l.b16 %v626
    %v705 = vunpack.c.h.b16 %v626
    %v706 = vunpack.c.l.b16 %v627
    %v707 = vunpack.c.h.b16 %v627
    %v708 = vunpack.c.l.b16 %v628
    %v709 = vunpack.c.h.b16 %v628
    %v710 = vunpack.c.l.b16 %v629
    %v711 = vunpack.c.h.b16 %v629
    %v712 = vunpack.c.l.b16 %v630
    %v713 = vunpack.c.h.b16 %v630
    %v714 = vunpack.c.l.b16 %v631
    %v715 = vunpack.c.h.b16 %v631
    %v716 = vunpack.c.l.b16 %v632
    %v717 = vunpack.c.h.b16 %v632
    %v718 = vunpack.c.l.b16 %v633
    %v719 = vunpack.c.h.b16 %v633
    %v720 = vunpack.c.l.b16 %v634
    %v721 = vunpack.c.h.b16 %v634
    %v722 = vunpack.c.l.b16 %v635
    %v723 = vunpack.c.h.b16 %v635
    %v724 = vunpack.c.l.b16 %v636
    %v725 = vunpack.c.h.b16 %v636
    %v726 = vunpack.c.l.b16 %v637
    %v727 = vunpack.c.h.b16 %v637
    %v728 = vunpack.c.l.b16 %v638
    %v729 = vunpack.c.h.b16 %v638
    %v730 = vunpack.c.l.b16 %v639
    %v731 = vunpack.c.h.b16 %v639
    %v732 = vunpack.c.l.b16 %v640
    %v733 = vunpack.c.h.b16 %v640
    %v734 = vunpack.c.l.b16 %v641
    %v735 = vunpack.c.h.b16 %v641
    %v736 = vunpack.c.l.b16 %v642
    %v737 = vunpack.c.h.b16 %v642
    %v738 = vunpack.c.l.b16 %v643
    %v739 = vunpack.c.h.b16 %v643
    %v740 = vunpack.c.l.b16 %v644
    %v741 = vunpack.c.h.b16 %v644
    %v742 = vunpack.c.l.b16 %v645
    %v743 = vunpack.c.h.b16 %v645
    %v744 = vunpack.c.l.b16 %v646
    %v745 = vunpack.c.h.b16 %v646
    %v746 = vunpack.c.l.b16 %v647
    %v747 = vunpack.c.h.b16 %v647
    %v748 = vunpack.c.l.b16 %v648
    %v749 = vunpack.c.h.b16 %v648
    %v750 = vpack.c.b16 %v688, %v686
    %v751 = vpack.c.b16 %v689, %v687
    %v752 = vpack.c.b16 %v692, %v690
    %v753 = vpack.c.b16 %v693, %v691
    %v754 = vpack.c.b16 %v696, %v694
    %v755 = vpack.c.b16 %v697, %v695
    %v756 = vpack.c.b16 %v700, %v698
    %v757 = vpack.c.b16 %v701, %v699
    %v758 = vpack.c.b16 %v704, %v702
    %v759 = vpack.c.b16 %v705, %v703
    %v760 = vpack.c.b16 %v708, %v706
    %v761 = vpack.c.b16 %v709, %v707
    %v762 = vpack.c.b16 %v712, %v710
    %v763 = vpack.c.b16 %v713, %v711
    %v764 = vpack.c.b16 %v716, %v714
    %v765 = vpack.c.b16 %v717, %v715
    %v766 = vpack.c.b16 %v720, %v718
    %v767 = vpack.c.b16 %v721, %v719
    %v768 = vpack.c.b16 %v724, %v722
    %v769 = vpack.c.b16 %v725, %v723
    %v770 = vpack.c.b16 %v728, %v726
    %v771 = vpack.c.b16 %v729, %v727
    %v772 = vpack.c.b16 %v732, %v730
    %v773 = vpack.c.b16 %v733, %v731
    %v774 = vpack.c.b16 %v736, %v734
    %v775 = vpack.c.b16 %v737, %v735
    %v776 = vpack.c.b16 %v740, %v738
    %v777 = vpack.c.b16 %v741, %v739
    %v778 = vpack.c.b16 %v744, %v742
    %v779 = vpack.c.b16 %v745, %v743
    %v780 = vpack.c.b16 %v748, %v746
    %v781 = vpack.c.b16 %v749, %v747
    %814 = vmatpush.bf16.msra.mxu0 %v764
    %815 = vmatpush.bf16.msra.mxu0 %v762
    %816 = vmatpush.bf16.msra.mxu0 %v760
    %817 = vmatpush.bf16.msra.mxu0 %v758
    %818 = vmatpush.bf16.msra.mxu0 %v756
    %819 = vmatpush.bf16.msra.mxu0 %v754
    %820 = vmatpush.bf16.msra.mxu0 %v752
    %821 = vmatpush.bf16.msra.mxu0 %v750
    %822 = vmatmul.bf16.gmra.mxu0 %v615
    %v823 = vpop.f32.mrf.mxu0
    %v824 = vadd.f32 %v650, %v823
    %v825 = vpop.f32.mrf.mxu0
    %826 = vdwg.mxu0
    %827 = vmatpush.bf16.msra.mxu0 %v780
    %828 = vmatpush.bf16.msra.mxu0 %v778
    %829 = vmatpush.bf16.msra.mxu0 %v776
    %830 = vmatpush.bf16.msra.mxu0 %v774
    %831 = vmatpush.bf16.msra.mxu0 %v772
    %832 = vmatpush.bf16.msra.mxu0 %v770
    %833 = vmatpush.bf16.msra.mxu0 %v768
    %834 = vmatpush.bf16.msra.mxu0 %v766
    %835 = vmatmul.bf16.gmra.mxu0 %v616
    %v836 = vpop.f32.mrf.mxu0
    %v837 = vadd.f32 %v824, %v836
    %v838 = vpop.f32.mrf.mxu0
    %839 = vdwg.mxu0
    %840 = vmatpush.bf16.msra.mxu0 %v765
    %841 = vmatpush.bf16.msra.mxu0 %v763
    %842 = vmatpush.bf16.msra.mxu0 %v761
    %843 = vmatpush.bf16.msra.mxu0 %v759
    %844 = vmatpush.bf16.msra.mxu0 %v757
    %845 = vmatpush.bf16.msra.mxu0 %v755
    %846 = vmatpush.bf16.msra.mxu0 %v753
    %847 = vmatpush.bf16.msra.mxu0 %v751
    %848 = vmatmul.bf16.gmra.mxu0 %v615
    %v849 = vpop.f32.mrf.mxu0
    %v850 = vadd.f32 %v651, %v849
    %v851 = vpop.f32.mrf.mxu0
    %852 = vdwg.mxu0
    %853 = vmatpush.bf16.msra.mxu0 %v781
    %854 = vmatpush.bf16.msra.mxu0 %v779
    %855 = vmatpush.bf16.msra.mxu0 %v777
    %856 = vmatpush.bf16.msra.mxu0 %v775
    %857 = vmatpush.bf16.msra.mxu0 %v773
    %858 = vmatpush.bf16.msra.mxu0 %v771
    %859 = vmatpush.bf16.msra.mxu0 %v769
    %860 = vmatpush.bf16.msra.mxu0 %v767
    %861 = vmatmul.bf16.gmra.mxu0 %v616
    %v862 = vpop.f32.mrf.mxu0
    %v863 = vadd.f32 %v850, %v862
    %v864 = vpop.f32.mrf.mxu0
    %865 = vdwg.mxu0
    %vm866 = vcmp.ge.f32.partialorder %v837, 0.0
    %vm867 = vcmp.ge.f32.partialorder %v863, 0.0
    %v868 = vmul.f32 %v837, 0.2
    %v869 = vmul.f32 %v863, 0.2
    %v870 = vsel %vm866, %v837, %v868
    %v871 = vsel %vm867, %v863, %v869
    %v872 = vpack.c.bf16 %v870, %v870
    %v873 = vpack.c.bf16 %v871, %v871
    %v874 = vld [vmem:[#allocation9] sm:$0xf]
    %v875 = vld [vmem:[#allocation9 + $0x4] sm:$0xf]
    %v876 = vld [vmem:[#allocation9 + $0x8] sm:$0xf]
    %v877 = vld [vmem:[#allocation9 + $0xc] sm:$0xf]
    %v878 = vld [vmem:[#allocation9 + $0x10] sm:$0xf]
    %v879 = vld [vmem:[#allocation9 + $0x14] sm:$0xf]
    %v880 = vld [vmem:[#allocation9 + $0x18] sm:$0xf]
    %v881 = vld [vmem:[#allocation9 + $0x1c] sm:$0xf]
    %v882 = vld [vmem:[#allocation9 + $0x20] sm:$0xf]
    %v883 = vld [vmem:[#allocation9 + $0x24] sm:$0xf]
    %v884 = vld [vmem:[#allocation9 + $0x28] sm:$0xf]
    %v885 = vld [vmem:[#allocation9 + $0x2c] sm:$0xf]
    %v886 = vld [vmem:[#allocation9 + $0x30] sm:$0xf]
    %v887 = vld [vmem:[#allocation9 + $0x34] sm:$0xf]
    %v888 = vld [vmem:[#allocation9 + $0x38] sm:$0xf]
    %v889 = vld [vmem:[#allocation9 + $0x3c] sm:$0xf]
    %v890 = vld [vmem:[#allocation9 + $0x40] sm:$0xf]
    %v891 = vld [vmem:[#allocation9 + $0x44] sm:$0xf]
    %v892 = vld [vmem:[#allocation9 + $0x48] sm:$0xf]
    %v893 = vld [vmem:[#allocation9 + $0x4c] sm:$0xf]
    %v894 = vld [vmem:[#allocation9 + $0x50] sm:$0xf]
    %v895 = vld [vmem:[#allocation9 + $0x54] sm:$0xf]
    %v896 = vld [vmem:[#allocation9 + $0x58] sm:$0xf]
    %v897 = vld [vmem:[#allocation9 + $0x5c] sm:$0xf]
    %v898 = vld [vmem:[#allocation9 + $0x60] sm:$0xf]
    %v899 = vld [vmem:[#allocation9 + $0x64] sm:$0xf]
    %v900 = vld [vmem:[#allocation9 + $0x68] sm:$0xf]
    %v901 = vld [vmem:[#allocation9 + $0x6c] sm:$0xf]
    %v902 = vld [vmem:[#allocation9 + $0x70] sm:$0xf]
    %v903 = vld [vmem:[#allocation9 + $0x74] sm:$0xf]
    %v904 = vld [vmem:[#allocation9 + $0x78] sm:$0xf]
    %v905 = vld [vmem:[#allocation9 + $0x7c] sm:$0xf]
    %v938 = vunpack.c.l.b16 %v874
    %v939 = vunpack.c.l.b16 %v875
    %v940 = vunpack.c.l.b16 %v876
    %v941 = vunpack.c.l.b16 %v877
    %v942 = vunpack.c.l.b16 %v878
    %v943 = vunpack.c.l.b16 %v879
    %v944 = vunpack.c.l.b16 %v880
    %v945 = vunpack.c.l.b16 %v881
    %v946 = vunpack.c.l.b16 %v882
    %v947 = vunpack.c.l.b16 %v883
    %v948 = vunpack.c.l.b16 %v884
    %v949 = vunpack.c.l.b16 %v885
    %v950 = vunpack.c.l.b16 %v886
    %v951 = vunpack.c.l.b16 %v887
    %v952 = vunpack.c.l.b16 %v888
    %v953 = vunpack.c.l.b16 %v889
    %v954 = vunpack.c.l.b16 %v890
    %v955 = vunpack.c.l.b16 %v891
    %v956 = vunpack.c.l.b16 %v892
    %v957 = vunpack.c.l.b16 %v893
    %v958 = vunpack.c.l.b16 %v894
    %v959 = vunpack.c.l.b16 %v895
    %v960 = vunpack.c.l.b16 %v896
    %v961 = vunpack.c.l.b16 %v897
    %v962 = vunpack.c.l.b16 %v898
    %v963 = vunpack.c.l.b16 %v899
    %v964 = vunpack.c.l.b16 %v900
    %v965 = vunpack.c.l.b16 %v901
    %v966 = vunpack.c.l.b16 %v902
    %v967 = vunpack.c.l.b16 %v903
    %v968 = vunpack.c.l.b16 %v904
    %v969 = vunpack.c.l.b16 %v905
    %v970 = vpack.c.b16 %v939, %v938
    %v971 = vpack.c.b16 %v941, %v940
    %v972 = vpack.c.b16 %v943, %v942
    %v973 = vpack.c.b16 %v945, %v944
    %v974 = vpack.c.b16 %v947, %v946
    %v975 = vpack.c.b16 %v949, %v948
    %v976 = vpack.c.b16 %v951, %v950
    %v977 = vpack.c.b16 %v953, %v952
    %v978 = vpack.c.b16 %v955, %v954
    %v979 = vpack.c.b16 %v957, %v956
    %v980 = vpack.c.b16 %v959, %v958
    %v981 = vpack.c.b16 %v961, %v960
    %v982 = vpack.c.b16 %v963, %v962
    %v983 = vpack.c.b16 %v965, %v964
    %v984 = vpack.c.b16 %v967, %v966
    %v985 = vpack.c.b16 %v969, %v968
    %1002 = vmatpush.bf16.msra.mxu0 %v977
    %1003 = vmatpush.bf16.msra.mxu0 %v976
    %1004 = vmatpush.bf16.msra.mxu0 %v975
    %1005 = vmatpush.bf16.msra.mxu0 %v974
    %1006 = vmatpush.bf16.msra.mxu0 %v973
    %1007 = vmatpush.bf16.msra.mxu0 %v972
    %1008 = vmatpush.bf16.msra.mxu0 %v971
    %1009 = vmatpush.bf16.msra.mxu0 %v970
    %1010 = vmatmul.bf16.gmra.mxu0 %v872
    %v1011 = vpop.f32.mrf.mxu0
    %v1012 = vadd.f32 %v107, %v1011
    %v1013 = vpop.f32.mrf.mxu0
    %1014 = vdwg.mxu0
    %1015 = vmatpush.bf16.msra.mxu0 %v985
    %1016 = vmatpush.bf16.msra.mxu0 %v984
    %1017 = vmatpush.bf16.msra.mxu0 %v983
    %1018 = vmatpush.bf16.msra.mxu0 %v982
    %1019 = vmatpush.bf16.msra.mxu0 %v981
    %1020 = vmatpush.bf16.msra.mxu0 %v980
    %1021 = vmatpush.bf16.msra.mxu0 %v979
    %1022 = vmatpush.bf16.msra.mxu0 %v978
    %1023 = vmatmul.bf16.gmra.mxu0 %v873
    %v1024 = vpop.f32.mrf.mxu0
    %v1025 = vadd.f32 %v1012, %v1024
    %v1026 = vpop.f32.mrf.mxu0
    %1027 = vdwg.mxu0
    %1028 = vst [vmem:[#allocation12] sm:$0xff] %v1025
    // Predicated region
    $region38: #{model_bn_forward.1} parent=1 // pred_check
      _
    $region39: #{model_bn_forward.1} parent=1 // pred_check_branch
      %1030 = sbr.rel (0) target = $region41
    $region40: #{model_bn_forward.1} parent=1 // pred_region
      %1032 = vsyncadd [#allocation6], 0
      %s1034 = sshll.u32 [#allocation12], 4
      %s1035 = int_to_ptr.vmem [resolvable:$true] %s1034
      %s1036 = sshll.u32 %s6, 4
      %s1037 = int_to_ptr.hbm [resolvable:$true] %s1036
      %1039 = dma.vmem_to_hbm [thread:$0]  %s1035, 128, %s1037, [#allocation6]
    $region41: #{model_bn_forward.1} parent=1 // pred_fallthru
      _
    // Predicated region
    $region42: #{model_bn_forward.1} parent=1 // pred_check
      _
    $region43: #{model_bn_forward.1} parent=1 // pred_check_branch
      %1041 = sbr.rel (0) target = $region45
    $region44: #{model_bn_forward.1} parent=1 // pred_region
      %1043 = dma.done [#allocation6], 128
    $region45: #{model_bn_forward.1} parent=1 // pred_fallthru
      _
    %1044 = vsyncpa [#allocation5], 1
    %1045 = vsyncpa [#allocation8], 1
    %1046 = vsyncpa [#allocation11], 1
    %1047 = vsyncpa [#allocation6], 1

</llo_original>
